<compile_context>
chip_gen: v7x
topology: tpu7x:2x2x1
jax: 0.10.0
libtpu: 0.0.40
codegen_flags: <defaults>
</compile_context>

<pallas_src>
import jax
import jax.numpy as jnp
from jax.experimental import pallas as pl
from jax.experimental.pallas import tpu as pltpu

LANE = 128


def _round_up(x, m):
    return (x + m - 1) // m * m


def edge_predictor_kernel(x_ref, w1_ref, b1_ref, w2_ref, b2_ref, out_ref):
    # ---- Layer 1: (TILE_B, 2E) @ (2E, Hp) on the MXU, f32 accumulate ----
    h = jnp.dot(x_ref[...], w1_ref[...], preferred_element_type=jnp.float32)
    h = jnp.maximum(h + b1_ref[...], 0.0)                      # bias + ReLU (VPU)

    # ---- Layer 2 (out_features == 1): VPU mul + XLU reduce, lane-dense result ----
    # An N=1 MXU matmul would use 1/128 of the MXU columns and force masked
    # width-1 stores.  Instead: aligned transpose of h (XLU, overlaps with MXU/DMA
    # slots), lane-broadcast multiply by the (Hp, 1) w2 column, sublane reduce
    # -> (1, TILE_B) lane-dense slab.
    ht = jnp.transpose(h)                                       # (Hp, TILE_B)
    o = jnp.sum(ht * w2_ref[...], axis=0, keepdims=True)        # (1, TILE_B)
    out_ref[...] = (o + b2_ref[...]).astype(out_ref.dtype)


def edge_predictor_forward(x, w1, b1, w2, b2, *, max_tile_b=1024):
    """EdgePredictor forward: relu(x @ w1 + b1) @ w2 + b2 -> (B, 1) float32.

    x: (B, 2*embed_size); w1: (2E, H); b1: (1, H) or (H,); w2: (H, 1); b2: (1, 1).
    """
    B, in_dim = x.shape
    H = w1.shape[1]
    Hp = _round_up(H, LANE)       # pad hidden width to the 128-lane boundary

    # ---- wrapper-side layout plumbing (zero padding is mathematically a no-op) ----
    w1p = jnp.pad(w1.astype(jnp.float32), ((0, 0), (0, Hp - H)))
    b1p = jnp.pad(b1.reshape(1, -1).astype(jnp.float32), ((0, 0), (0, Hp - H)))
    w2p = jnp.pad(w2.reshape(-1, 1).astype(jnp.float32), ((0, Hp - H), (0, 0)))
    b2p = b2.reshape(1, 1).astype(jnp.float32)

    # Large batch tile amortizes the ~0.35 us per-grid-step overhead and keeps the
    # DMA pipeline fed; clamped for small batches and kept a multiple of 128 so the
    # lane-dense output block is stored unmasked.
    tile_b = _round_up(min(max_tile_b, _round_up(B, LANE)), LANE)
    b_pad = _round_up(B, tile_b)
    xp = jnp.pad(x.astype(jnp.float32), ((0, b_pad - B), (0, 0)))
    # TODO(synk): on v6e/v7x, shipping x/w1 as bfloat16 halves HBM traffic on this
    # memory-bound op; kept f32 here to match the PyTorch f32 reference tightly.

    grid = (b_pad // tile_b,)

    cost = pl.CostEstimate(
        flops=int(2 * b_pad * in_dim * Hp + 3 * b_pad * Hp),
        transcendentals=0,
        bytes_accessed=int(xp.size * 4 + b_pad * 4
                           + (w1p.size + b1p.size + w2p.size + b2p.size) * 4),
    )

    out = pl.pallas_call(
        edge_predictor_kernel,
        out_shape=jax.ShapeDtypeStruct((1, b_pad), jnp.float32),
        grid_spec=pltpu.PrefetchScalarGridSpec(
            num_scalar_prefetch=0,
            grid=grid,
            in_specs=[
                pl.BlockSpec((tile_b, in_dim), lambda i: (i, 0)),   # streamed x tile
                pl.BlockSpec((in_dim, Hp), lambda i: (0, 0)),       # VMEM-resident
                pl.BlockSpec((1, Hp), lambda i: (0, 0)),
                pl.BlockSpec((Hp, 1), lambda i: (0, 0)),
                pl.BlockSpec((1, 1), lambda i: (0, 0)),
            ],
            out_specs=pl.BlockSpec((1, tile_b), lambda i: (0, i)),  # lane-dense out
        ),
        compiler_params=pltpu.CompilerParams(
            dimension_semantics=("parallel",),   # shard batch across TCs on v7x
            vmem_limit_bytes=32 * 1024 * 1024,
        ),
        cost_estimate=cost,
    )(xp, w1p, b1p, w2p, b2p)

    return out[0, :B].reshape(B, 1)


def init_params(key, embed_size, dims=(100,)):
    """PyTorch-style uniform(+/- 1/sqrt(fan_in)) init; weights stored as (in, out)."""
    in_dim = 2 * embed_size
    hidden = dims[0]
    k1, k2, k3, k4 = jax.random.split(key, 4)

    bound1 = 1.0 / jnp.sqrt(in_dim)
    w1 = jax.random.uniform(k1, (in_dim, hidden), jnp.float32, -bound1, bound1)
    b1 = jax.random.uniform(k2, (1, hidden), jnp.float32, -bound1, bound1)

    bound2 = 1.0 / jnp.sqrt(hidden)
    w2 = jax.random.uniform(k3, (hidden, 1), jnp.float32, -bound2, bound2)
    b2 = jax.random.uniform(k4, (1, 1), jnp.float32, -bound2, bound2)
    return w1, b1, w2, b2


def reference_forward(x, w1, b1, w2, b2):
    h = jnp.maximum(x @ w1 + b1, 0.0)
    # Second layer evaluated elementwise in f32 (exact), matching the kernel's math.
    return jnp.sum(h * w2.reshape(1, -1), axis=-1, keepdims=True) + b2


if __name__ == "__main__":
    embed_size = 16          # input feature dim = 2 * embed_size = 32
    batch = 8
    dims = (100,)            # hidden width, as in EdgePredictor(embed_size, dims=[100])

    key = jax.random.PRNGKey(0)
    kx, kp, kx2 = jax.random.split(key, 3)
    x = jax.random.normal(kx, (batch, 2 * embed_size), jnp.float32)
    w1, b1, w2, b2 = init_params(kp, embed_size, dims)

    out = edge_predictor_forward(x, w1, b1, w2, b2)
    out = jax.block_until_ready(out)
    ref = reference_forward(x, w1, b1, w2, b2)
    assert out.shape == (batch, 1)
    assert jnp.allclose(out, ref, atol=1e-4, rtol=1e-4), "mismatch vs JAX reference"

    # Second small check: batch not divisible by the tile -> exercises multi-tile
    # grid, padding and the lane-dense output reshape.
    batch2 = 300
    x2 = jax.random.normal(kx2, (batch2, 2 * embed_size), jnp.float32)
    out2 = jax.block_until_ready(
        edge_predictor_forward(x2, w1, b1, w2, b2, max_tile_b=128))
    ref2 = reference_forward(x2, w1, b1, w2, b2)
    assert out2.shape == (batch2, 1)
    assert jnp.allclose(out2, ref2, atol=1e-4, rtol=1e-4), "mismatch (multi-tile)"

    print("KERNEL_OK")
</pallas_src>

<mosaic_0001>
module attributes {stable_mosaic.version = 11 : i64} {
  func.func @edge_predictor_kernel(%arg0: i32, %arg1: memref<128x32xf32, #tpu.memory_space<vmem>>, %arg2: memref<32x128xf32, #tpu.memory_space<vmem>>, %arg3: memref<1x128xf32, #tpu.memory_space<vmem>>, %arg4: memref<128x1xf32, #tpu.memory_space<vmem>>, %arg5: memref<1x1xf32, #tpu.memory_space<vmem>>, %arg6: memref<1x128xf32, #tpu.memory_space<vmem>>) attributes {dimension_semantics = [#tpu.dimension_semantics<parallel>], iteration_bounds = array<i64: 1>, scalar_prefetch = 0 : i64, scratch_operands = 0 : i64, tpu.core_type = #tpu.core_type<tc>, window_params = [{transform_indices = @transform_0, window_bounds = array<i64: 128, 32>}, {pipeline_mode = #tpu.pipeline_mode<synchronous>, transform_indices = @transform_1, window_bounds = array<i64: 32, 128>}, {pipeline_mode = #tpu.pipeline_mode<synchronous>, transform_indices = @transform_2, window_bounds = array<i64: 1, 128>}, {pipeline_mode = #tpu.pipeline_mode<synchronous>, transform_indices = @transform_3, window_bounds = array<i64: 128, 1>}, {pipeline_mode = #tpu.pipeline_mode<synchronous>, transform_indices = @transform_4, window_bounds = array<i64: 1, 1>}, {transform_indices = @transform_5, window_bounds = array<i64: 1, 128>}]} {
    %c0 = arith.constant 0 : index
    %c0_0 = arith.constant 0 : index
    %0 = vector.load %arg1[%c0, %c0_0] : memref<128x32xf32, #tpu.memory_space<vmem>>, vector<128x32xf32>
    %c0_1 = arith.constant 0 : index
    %c0_2 = arith.constant 0 : index
    %1 = vector.load %arg2[%c0_1, %c0_2] : memref<32x128xf32, #tpu.memory_space<vmem>>, vector<32x128xf32>
    %cst = arith.constant dense<0.000000e+00> : vector<128x128xf32>
    %2 = tpu.matmul %0, %1, %cst {dimension_numbers = #tpu.dot_dimension_numbers<[1], [0], [0], [1], [0, 0, 1, 1], [], []>} : vector<128x32xf32>, vector<32x128xf32>, vector<128x128xf32> -> vector<128x128xf32>
    %c0_3 = arith.constant 0 : index
    %c0_4 = arith.constant 0 : index
    %3 = vector.load %arg3[%c0_3, %c0_4] : memref<1x128xf32, #tpu.memory_space<vmem>>, vector<1x128xf32>
    %4 = vector.broadcast %3 : vector<1x128xf32> to vector<128x128xf32>
    %5 = arith.addf %2, %4 : vector<128x128xf32>
    %cst_5 = arith.constant 0.000000e+00 : f32
    %6 = vector.broadcast %cst_5 : f32 to vector<128x128xf32>
    %7 = arith.maximumf %5, %6 : vector<128x128xf32>
    %8 = tpu.transpose %7, [1, 0] : vector<128x128xf32> -> vector<128x128xf32>
    %c0_6 = arith.constant 0 : index
    %c0_7 = arith.constant 0 : index
    %9 = vector.load %arg4[%c0_6, %c0_7] : memref<128x1xf32, #tpu.memory_space<vmem>>, vector<128x1xf32>
    %10 = vector.broadcast %9 : vector<128x1xf32> to vector<128x128xf32>
    %11 = arith.mulf %8, %10 : vector<128x128xf32>
    %cst_8 = arith.constant dense<0.000000e+00> : vector<128xf32>
    %12 = vector.multi_reduction <add>, %11, %cst_8 [0] : vector<128x128xf32> to vector<128xf32>
    %13 = vector.shape_cast %12 : vector<128xf32> to vector<1x128xf32>
    %c0_9 = arith.constant 0 : index
    %c0_10 = arith.constant 0 : index
    %14 = vector.load %arg5[%c0_9, %c0_10] : memref<1x1xf32, #tpu.memory_space<vmem>>, vector<1x1xf32>
    %15 = vector.broadcast %14 : vector<1x1xf32> to vector<1x128xf32>
    %16 = arith.addf %13, %15 : vector<1x128xf32>
    %c0_11 = arith.constant 0 : index
    %c0_12 = arith.constant 0 : index
    %17 = vector.load %arg6[%c0_11, %c0_12] : memref<1x128xf32, #tpu.memory_space<vmem>>, vector<1x128xf32>
    tpu.vector_store %arg6[%c0_11, %c0_12], %16 {strides = array<i32>} : memref<1x128xf32, #tpu.memory_space<vmem>>, vector<1x128xf32>,
    return
  }
  func.func @transform_0(%arg0: i32) -> (i32, i32) {
    %c0_i32 = arith.constant 0 : i32
    %c0_i32_0 = arith.constant 0 : i32
    return %arg0, %c0_i32 : i32, i32
  }
  func.func @transform_1(%arg0: i32) -> (i32, i32) {
    %c0_i32 = arith.constant 0 : i32
    %c0_i32_0 = arith.constant 0 : i32
    %c0_i32_1 = arith.constant 0 : i32
    return %c0_i32, %c0_i32_0 : i32, i32
  }
  func.func @transform_2(%arg0: i32) -> (i32, i32) {
    %c0_i32 = arith.constant 0 : i32
    %c0_i32_0 = arith.constant 0 : i32
    %c0_i32_1 = arith.constant 0 : i32
    return %c0_i32, %c0_i32_0 : i32, i32
  }
  func.func @transform_3(%arg0: i32) -> (i32, i32) {
    %c0_i32 = arith.constant 0 : i32
    %c0_i32_0 = arith.constant 0 : i32
    %c0_i32_1 = arith.constant 0 : i32
    return %c0_i32, %c0_i32_0 : i32, i32
  }
  func.func @transform_4(%arg0: i32) -> (i32, i32) {
    %c0_i32 = arith.constant 0 : i32
    %c0_i32_0 = arith.constant 0 : i32
    %c0_i32_1 = arith.constant 0 : i32
    return %c0_i32, %c0_i32_0 : i32, i32
  }
  func.func @transform_5(%arg0: i32) -> (i32, i32) {
    %c0_i32 = arith.constant 0 : i32
    %c0_i32_0 = arith.constant 0 : i32
    return %c0_i32, %arg0 : i32, i32
  }
}

</mosaic_0001>

<llo_original>
// kernel: tpu_custom_call.1
$region0: #{tpu_custom_call.1}
  #allocation0 [shape = 'u32[]', space=smem, size = 0x4, offset = 0x4, fixed_abs, tag = 'smem constant byte address 0x4 - core index']
  #allocation1 [shape = 'u32[144,128]{1,0:T(1,128)}', space=vmem, size = 0x12000, scoped, tag = 'internal scratch']
  #allocation2 [shape = 'f32[1,1]{1,0:T(1,128)S(1)}', space=vmem, size = 0x200, scoped, tag = 'scoped memory for tpu_custom_call.1']
  %s0 = inlined_call_operand.vmem [shape: f32[128,32], index: 0, kind: input, shape index: {}]
  %s1 = inlined_call_operand.vmem [shape: f32[32,128], index: 1, kind: input, shape index: {}]
  %s2 = inlined_call_operand.vmem [shape: f32[1,128], index: 2, kind: input, shape index: {}]
  %s3 = inlined_call_operand.vmem [shape: f32[128,1], index: 3, kind: input, shape index: {}]
  %s4 = inlined_call_operand.<no memory space> [shape: f32[1,1], index: 4, kind: input, shape index: {}]
  %s5 = inlined_call_operand.hbm [shape: f32[1,128], index: 5, kind: output, shape index: {}]
  %s6 = sld [smem:[#allocation0]]
  $region30: #{tpu_custom_call.1} parent=0
    _
  %s8 = ssub.s32 1, %s6
  %s9 = scalar_select 0, %s8, %s6
  %v10 = vstv %s4
  %11 = vst [vmem:[#allocation2] sm:$0x1] %v10
  $region1: #{tpu_custom_call.1} parent=0
    #allocation3 [shape = 'u8[512]{0}', space=vmem, size = 0x400, scoped, tag = 'output window, operand 0, single buffered']
    #allocation4 [shape = 's32[1]{0}', space=sflag, size = 0x4, scoped, tag = 'scoped memory for tpu_custom_call.1']
    %12 = vsyncpa [#allocation4], 0
    // Predicated region
    $region2: #{tpu_custom_call.1} parent=1 // pred_check
      _
    $region3: #{tpu_custom_call.1} parent=1 // pred_check_branch
      %14 = sbr.rel (0) target = $region5
    $region4: #{tpu_custom_call.1} parent=1 // pred_region
      _
    $region5: #{tpu_custom_call.1} parent=1 // pred_fallthru
      _
    // Predicated region
    $region6: #{tpu_custom_call.1} parent=1 // pred_check
      _
    $region7: #{tpu_custom_call.1} parent=1 // pred_check_branch
      %16 = sbr.rel (0) target = $region9
    $region8: #{tpu_custom_call.1} parent=1 // pred_region
      _
    $region9: #{tpu_custom_call.1} parent=1 // pred_fallthru
      _
    // Predicated region
    $region10: #{tpu_custom_call.1} parent=1 // pred_check
      _
    $region11: #{tpu_custom_call.1} parent=1 // pred_check_branch
      %18 = sbr.rel (0) target = $region13
    $region12: #{tpu_custom_call.1} parent=1 // pred_region
      _
    $region13: #{tpu_custom_call.1} parent=1 // pred_fallthru
      _
    // Predicated region
    $region14: #{tpu_custom_call.1} parent=1 // pred_check
      _
    $region15: #{tpu_custom_call.1} parent=1 // pred_check_branch
      %20 = sbr.rel (0) target = $region17
    $region16: #{tpu_custom_call.1} parent=1 // pred_region
      _
    $region17: #{tpu_custom_call.1} parent=1 // pred_fallthru
      _
    // Predicated region
    $region18: #{tpu_custom_call.1} parent=1 // pred_check
      _
    $region19: #{tpu_custom_call.1} parent=1 // pred_check_branch
      %22 = sbr.rel (0) target = $region21
    $region20: #{tpu_custom_call.1} parent=1 // pred_region
      _
    $region21: #{tpu_custom_call.1} parent=1 // pred_fallthru
      _
    %v23 = vld [vmem:[%s0] sm:$0xff]
    %v24 = vld [vmem:[%s0 + $0x8] sm:$0xff]
    %v25 = vld [vmem:[%s0 + $0x10] sm:$0xff]
    %v26 = vld [vmem:[%s0 + $0x18] sm:$0xff]
    %v27 = vld [vmem:[%s0 + $0x20] sm:$0xff]
    %v28 = vld [vmem:[%s0 + $0x28] sm:$0xff]
    %v29 = vld [vmem:[%s0 + $0x30] sm:$0xff]
    %v30 = vld [vmem:[%s0 + $0x38] sm:$0xff]
    %v31 = vld [vmem:[%s0 + $0x40] sm:$0xff]
    %v32 = vld [vmem:[%s0 + $0x48] sm:$0xff]
    %v33 = vld [vmem:[%s0 + $0x50] sm:$0xff]
    %v34 = vld [vmem:[%s0 + $0x58] sm:$0xff]
    %v35 = vld [vmem:[%s0 + $0x60] sm:$0xff]
    %v36 = vld [vmem:[%s0 + $0x68] sm:$0xff]
    %v37 = vld [vmem:[%s0 + $0x70] sm:$0xff]
    %v38 = vld [vmem:[%s0 + $0x78] sm:$0xff]
    %v39 = vld [vmem:[%s1] sm:$0xff]
    %v40 = vld [vmem:[%s1 + $0x8] sm:$0xff]
    %v41 = vld [vmem:[%s1 + $0x10] sm:$0xff]
    %v42 = vld [vmem:[%s1 + $0x18] sm:$0xff]
    %v43 = vld [vmem:[%s2] sm:$0x1]
    %v45 = vlaneseq
    %v46 = vshrl.u32 %v45, 7
    %v47 = vsub.s32 0, %v46
    %v48 = vrot.slane %v43, %v47
    %vm50 = vcmask 261120
    %v52 = vsel %vm50, %v23, 0
    %v55 = vsel %vm50, %v24, 0
    %v58 = vsel %vm50, %v25, 0
    %v61 = vsel %vm50, %v26, 0
    %v64 = vsel %vm50, %v27, 0
    %v67 = vsel %vm50, %v28, 0
    %v70 = vsel %vm50, %v29, 0
    %v73 = vsel %vm50, %v30, 0
    %v76 = vsel %vm50, %v31, 0
    %v79 = vsel %vm50, %v32, 0
    %v82 = vsel %vm50, %v33, 0
    %v85 = vsel %vm50, %v34, 0
    %v88 = vsel %vm50, %v35, 0
    %v91 = vsel %vm50, %v36, 0
    %v94 = vsel %vm50, %v37, 0
    %v97 = vsel %vm50, %v38, 0
    %99 = vmatprep.subr.mxu0 0.0
    %100 = vmatpush1.msra.mxu0 %v39
    %101 = vmatprep.subr.mxu0 0.0
    %102 = vmatpush1.msra.mxu0 %v40
    %103 = vmatprep.subr.mxu0 0.0
    %104 = vmatpush1.msra.mxu0 %v41
    %105 = vmatprep.subr.mxu0 0.0
    %106 = vmatpush1.msra.mxu0 %v42
    %107 = vmatprep.subr.mxu0 0.0
    %108 = vmatpush1.msra.mxu0 0.0
    %109 = vmatprep.subr.mxu0 0.0
    %110 = vmatpush1.msra.mxu0 0.0
    %111 = vmatprep.subr.mxu0 0.0
    %112 = vmatpush1.msra.mxu0 0.0
    %113 = vmatprep.subr.mxu0 0.0
    %114 = vmatpush1.msra.mxu0 0.0
    %115 = vmatprep.subr.mxu0 0.0
    %116 = vmatpush1.msra.mxu0 0.0
    %117 = vmatprep.subr.mxu0 0.0
    %118 = vmatpush1.msra.mxu0 0.0
    %119 = vmatprep.subr.mxu0 0.0
    %120 = vmatpush1.msra.mxu0 0.0
    %121 = vmatprep.subr.mxu0 0.0
    %122 = vmatpush1.msra.mxu0 0.0
    %123 = vmatprep.subr.mxu0 0.0
    %124 = vmatpush1.msra.mxu0 0.0
    %125 = vmatprep.subr.mxu0 0.0
    %126 = vmatpush1.msra.mxu0 0.0
    %127 = vmatprep.subr.mxu0 0.0
    %128 = vmatpush1.msra.mxu0 0.0
    %129 = vmatprep.subr.mxu0 0.0
    %130 = vmatpush1.msra.mxu0 0.0
    %131 = vmatprep.subr.mxu0 0.0
    %132 = vmatpush1.msra.mxu0 0.0
    %133 = vmatprep.subr.mxu0 0.0
    %134 = vmatpush1.msra.mxu0 0.0
    %135 = vmatprep.subr.mxu0 0.0
    %136 = vmatpush1.msra.mxu0 0.0
    %137 = vmatprep.subr.mxu0 0.0
    %138 = vmatpush1.msra.mxu0 0.0
    %139 = vmatprep.subr.mxu0 0.0
    %140 = vmatpush1.msra.mxu0 0.0
    %141 = vmatprep.subr.mxu0 0.0
    %142 = vmatpush1.msra.mxu0 0.0
    %143 = vmatprep.subr.mxu0 0.0
    %144 = vmatpush1.msra.mxu0 0.0
    %145 = vmatprep.subr.mxu0 0.0
    %146 = vmatpush1.msra.mxu0 0.0
    %147 = vmatprep.subr.mxu0 0.0
    %148 = vmatpush1.msra.mxu0 0.0
    %149 = vmatprep.subr.mxu0 0.0
    %150 = vmatpush1.msra.mxu0 0.0
    %151 = vmatprep.subr.mxu0 0.0
    %152 = vmatpush1.msra.mxu0 0.0
    %153 = vmatprep.subr.mxu0 0.0
    %154 = vmatpush1.msra.mxu0 0.0
    %155 = vmatprep.subr.mxu0 0.0
    %156 = vmatpush1.msra.mxu0 0.0
    %157 = vmatprep.subr.mxu0 0.0
    %158 = vmatpush1.msra.mxu0 0.0
    %159 = vmatprep.subr.mxu0 0.0
    %160 = vmatpush1.msra.mxu0 0.0
    %161 = vmatprep.subr.mxu0 0.0
    %162 = vmatpush1.msra.mxu0 0.0
    %163 = vmatprep.mubr.f32.mxu0 0.0
    %164 = vmatmul.mubr.f32.gmra.mrb[0].mxu0 %v52
    %v165 = vpop.f32.mrb[0].mxu0
    %v166 = vadd.f32 %v48, %v165
    %v167 = vpop.f32.mrb[0].mxu0
    %168 = vmatprep.mubr.f32.mxu0 0.0
    %169 = vmatmul.mubr.f32.gmra.mrb[0].mxu0 %v55
    %v170 = vpop.f32.mrb[0].mxu0
    %v171 = vadd.f32 %v48, %v170
    %v172 = vpop.f32.mrb[0].mxu0
    %173 = vmatprep.mubr.f32.mxu0 0.0
    %174 = vmatmul.mubr.f32.gmra.mrb[0].mxu0 %v58
    %v175 = vpop.f32.mrb[0].mxu0
    %v176 = vadd.f32 %v48, %v175
    %v177 = vpop.f32.mrb[0].mxu0
    %178 = vmatprep.mubr.f32.mxu0 0.0
    %179 = vmatmul.mubr.f32.gmra.mrb[0].mxu0 %v61
    %v180 = vpop.f32.mrb[0].mxu0
    %v181 = vadd.f32 %v48, %v180
    %v182 = vpop.f32.mrb[0].mxu0
    %183 = vmatprep.mubr.f32.mxu0 0.0
    %184 = vmatmul.mubr.f32.gmra.mrb[0].mxu0 %v64
    %v185 = vpop.f32.mrb[0].mxu0
    %v186 = vadd.f32 %v48, %v185
    %v187 = vpop.f32.mrb[0].mxu0
    %188 = vmatprep.mubr.f32.mxu0 0.0
    %189 = vmatmul.mubr.f32.gmra.mrb[0].mxu0 %v67
    %v190 = vpop.f32.mrb[0].mxu0
    %v191 = vadd.f32 %v48, %v190
    %v192 = vpop.f32.mrb[0].mxu0
    %193 = vmatprep.mubr.f32.mxu0 0.0
    %194 = vmatmul.mubr.f32.gmra.mrb[0].mxu0 %v70
    %v195 = vpop.f32.mrb[0].mxu0
    %v196 = vadd.f32 %v48, %v195
    %v197 = vpop.f32.mrb[0].mxu0
    %198 = vmatprep.mubr.f32.mxu0 0.0
    %199 = vmatmul.mubr.f32.gmra.mrb[0].mxu0 %v73
    %v200 = vpop.f32.mrb[0].mxu0
    %v201 = vadd.f32 %v48, %v200
    %v202 = vpop.f32.mrb[0].mxu0
    %203 = vmatprep.mubr.f32.mxu0 0.0
    %204 = vmatmul.mubr.f32.gmra.mrb[0].mxu0 %v76
    %v205 = vpop.f32.mrb[0].mxu0
    %v206 = vadd.f32 %v48, %v205
    %v207 = vpop.f32.mrb[0].mxu0
    %208 = vmatprep.mubr.f32.mxu0 0.0
    %209 = vmatmul.mubr.f32.gmra.mrb[0].mxu0 %v79
    %v210 = vpop.f32.mrb[0].mxu0
    %v211 = vadd.f32 %v48, %v210
    %v212 = vpop.f32.mrb[0].mxu0
    %213 = vmatprep.mubr.f32.mxu0 0.0
    %214 = vmatmul.mubr.f32.gmra.mrb[0].mxu0 %v82
    %v215 = vpop.f32.mrb[0].mxu0
    %v216 = vadd.f32 %v48, %v215
    %v217 = vpop.f32.mrb[0].mxu0
    %218 = vmatprep.mubr.f32.mxu0 0.0
    %219 = vmatmul.mubr.f32.gmra.mrb[0].mxu0 %v85
    %v220 = vpop.f32.mrb[0].mxu0
    %v221 = vadd.f32 %v48, %v220
    %v222 = vpop.f32.mrb[0].mxu0
    %223 = vmatprep.mubr.f32.mxu0 0.0
    %224 = vmatmul.mubr.f32.gmra.mrb[0].mxu0 %v88
    %v225 = vpop.f32.mrb[0].mxu0
    %v226 = vadd.f32 %v48, %v225
    %v227 = vpop.f32.mrb[0].mxu0
    %228 = vmatprep.mubr.f32.mxu0 0.0
    %229 = vmatmul.mubr.f32.gmra.mrb[0].mxu0 %v91
    %v230 = vpop.f32.mrb[0].mxu0
    %v231 = vadd.f32 %v48, %v230
    %v232 = vpop.f32.mrb[0].mxu0
    %233 = vmatprep.mubr.f32.mxu0 0.0
    %234 = vmatmul.mubr.f32.gmra.mrb[0].mxu0 %v94
    %v235 = vpop.f32.mrb[0].mxu0
    %v236 = vadd.f32 %v48, %v235
    %v237 = vpop.f32.mrb[0].mxu0
    %238 = vmatprep.mubr.f32.mxu0 0.0
    %239 = vmatmul.mubr.f32.gmra.mrb[0].mxu0 %v97
    %v240 = vpop.f32.mrb[0].mxu0
    %v241 = vadd.f32 %v48, %v240
    %v242 = vpop.f32.mrb[0].mxu0
    %243 = vdwg.mxu0
    %v244 = vmax.f32 %v166, 0.0
    %v245 = vmax.f32 %v171, 0.0
    %v246 = vmax.f32 %v176, 0.0
    %v247 = vmax.f32 %v181, 0.0
    %v248 = vmax.f32 %v186, 0.0
    %v249 = vmax.f32 %v191, 0.0
    %v250 = vmax.f32 %v196, 0.0
    %v251 = vmax.f32 %v201, 0.0
    %v252 = vmax.f32 %v206, 0.0
    %v253 = vmax.f32 %v211, 0.0
    %v254 = vmax.f32 %v216, 0.0
    %v255 = vmax.f32 %v221, 0.0
    %v256 = vmax.f32 %v226, 0.0
    %v257 = vmax.f32 %v231, 0.0
    %v258 = vmax.f32 %v236, 0.0
    %v259 = vmax.f32 %v241, 0.0
    %260 = vxpose.xlu0.b32.start [1/16] %v244, 128
    %261 = vxpose.xlu0.b32.cont [2/16] %v245, 128
    %262 = vxpose.xlu0.b32.cont [3/16] %v246, 128
    %263 = vxpose.xlu0.b32.cont [4/16] %v247, 128
    %264 = vxpose.xlu0.b32.cont [5/16] %v248, 128
    %265 = vxpose.xlu0.b32.cont [6/16] %v249, 128
    %266 = vxpose.xlu0.b32.cont [7/16] %v250, 128
    %267 = vxpose.xlu0.b32.cont [8/16] %v251, 128
    %268 = vxpose.xlu0.b32.cont [9/16] %v252, 128
    %269 = vxpose.xlu0.b32.cont [10/16] %v253, 128
    %270 = vxpose.xlu0.b32.cont [11/16] %v254, 128
    %271 = vxpose.xlu0.b32.cont [12/16] %v255, 128
    %272 = vxpose.xlu0.b32.cont [13/16] %v256, 128
    %273 = vxpose.xlu0.b32.cont [14/16] %v257, 128
    %274 = vxpose.xlu0.b32.cont [15/16] %v258, 128
    %275 = vxpose.xlu0.b32.end [16/16] %v259, 128
    %v276 = vpop.trf.xlu0
    %v277 = vpop.trf.xlu0
    %v278 = vpop.trf.xlu0
    %v279 = vpop.trf.xlu0
    %v280 = vpop.trf.xlu0
    %v281 = vpop.trf.xlu0
    %v282 = vpop.trf.xlu0
    %v283 = vpop.trf.xlu0
    %v284 = vpop.trf.xlu0
    %v285 = vpop.trf.xlu0
    %v286 = vpop.trf.xlu0
    %v287 = vpop.trf.xlu0
    %v288 = vpop.trf.xlu0
    %v289 = vpop.trf.xlu0
    %v290 = vpop.trf.xlu0
    %v291 = vpop.trf.xlu0
    %v292 = vld [vmem:[%s3] sm:$0xff]
    %v293 = vld [vmem:[%s3 + $0x8] sm:$0xff]
    %v294 = vld [vmem:[%s3 + $0x10] sm:$0xff]
    %v295 = vld [vmem:[%s3 + $0x18] sm:$0xff]
    %v296 = vld [vmem:[%s3 + $0x20] sm:$0xff]
    %v297 = vld [vmem:[%s3 + $0x28] sm:$0xff]
    %v298 = vld [vmem:[%s3 + $0x30] sm:$0xff]
    %v299 = vld [vmem:[%s3 + $0x38] sm:$0xff]
    %v300 = vld [vmem:[%s3 + $0x40] sm:$0xff]
    %v301 = vld [vmem:[%s3 + $0x48] sm:$0xff]
    %v302 = vld [vmem:[%s3 + $0x50] sm:$0xff]
    %v303 = vld [vmem:[%s3 + $0x58] sm:$0xff]
    %v304 = vld [vmem:[%s3 + $0x60] sm:$0xff]
    %v305 = vld [vmem:[%s3 + $0x68] sm:$0xff]
    %v306 = vld [vmem:[%s3 + $0x70] sm:$0xff]
    %v307 = vld [vmem:[%s3 + $0x78] sm:$0xff]
    %309 = vset.pattern.permute.xlu0 0
    %310 = vperm.xlu0 %309, %v292
    %v311 = vpop.permute.xlu0 %310
    %314 = vset.pattern.permute.xlu0 0
    %315 = vperm.xlu0 %314, %v293
    %v316 = vpop.permute.xlu0 %315
    %319 = vset.pattern.permute.xlu0 0
    %320 = vperm.xlu0 %319, %v294
    %v321 = vpop.permute.xlu0 %320
    %324 = vset.pattern.permute.xlu0 0
    %325 = vperm.xlu0 %324, %v295
    %v326 = vpop.permute.xlu0 %325
    %329 = vset.pattern.permute.xlu0 0
    %330 = vperm.xlu0 %329, %v296
    %v331 = vpop.permute.xlu0 %330
    %334 = vset.pattern.permute.xlu0 0
    %335 = vperm.xlu0 %334, %v297
    %v336 = vpop.permute.xlu0 %335
    %339 = vset.pattern.permute.xlu0 0
    %340 = vperm.xlu0 %339, %v298
    %v341 = vpop.permute.xlu0 %340
    %344 = vset.pattern.permute.xlu0 0
    %345 = vperm.xlu0 %344, %v299
    %v346 = vpop.permute.xlu0 %345
    %349 = vset.pattern.permute.xlu0 0
    %350 = vperm.xlu0 %349, %v300
    %v351 = vpop.permute.xlu0 %350
    %354 = vset.pattern.permute.xlu0 0
    %355 = vperm.xlu0 %354, %v301
    %v356 = vpop.permute.xlu0 %355
    %359 = vset.pattern.permute.xlu0 0
    %360 = vperm.xlu0 %359, %v302
    %v361 = vpop.permute.xlu0 %360
    %364 = vset.pattern.permute.xlu0 0
    %365 = vperm.xlu0 %364, %v303
    %v366 = vpop.permute.xlu0 %365
    %369 = vset.pattern.permute.xlu0 0
    %370 = vperm.xlu0 %369, %v304
    %v371 = vpop.permute.xlu0 %370
    %374 = vset.pattern.permute.xlu0 0
    %375 = vperm.xlu0 %374, %v305
    %v376 = vpop.permute.xlu0 %375
    %379 = vset.pattern.permute.xlu0 0
    %380 = vperm.xlu0 %379, %v306
    %v381 = vpop.permute.xlu0 %380
    %384 = vset.pattern.permute.xlu0 0
    %385 = vperm.xlu0 %384, %v307
    %v386 = vpop.permute.xlu0 %385
    %v388 = vmul.f32 %v276, %v311
    %v389 = vmul.f32 %v277, %v316
    %v390 = vmul.f32 %v278, %v321
    %v391 = vmul.f32 %v279, %v326
    %v392 = vmul.f32 %v280, %v331
    %v393 = vmul.f32 %v281, %v336
    %v394 = vmul.f32 %v282, %v341
    %v395 = vmul.f32 %v283, %v346
    %v396 = vmul.f32 %v284, %v351
    %v397 = vmul.f32 %v285, %v356
    %v398 = vmul.f32 %v286, %v361
    %v399 = vmul.f32 %v287, %v366
    %v400 = vmul.f32 %v288, %v371
    %v401 = vmul.f32 %v289, %v376
    %v402 = vmul.f32 %v290, %v381
    %v403 = vmul.f32 %v291, %v386
    %v404 = vadd.f32 %v388, %v389
    %v405 = vadd.f32 %v404, %v390
    %v406 = vadd.f32 %v405, %v391
    %v407 = vadd.f32 %v406, %v392
    %v408 = vadd.f32 %v407, %v393
    %v409 = vadd.f32 %v408, %v394
    %v410 = vadd.f32 %v409, %v395
    %v411 = vadd.f32 %v410, %v396
    %v412 = vadd.f32 %v411, %v397
    %v413 = vadd.f32 %v412, %v398
    %v414 = vadd.f32 %v413, %v399
    %v415 = vadd.f32 %v414, %v400
    %v416 = vadd.f32 %v415, %v401
    %v417 = vadd.f32 %v416, %v402
    %v418 = vadd.f32 %v417, %v403
    %v419 = vrot.slane %v418, 4
    %v420 = vadd.f32 %v418, %v419
    %v421 = vrot.slane %v420, 2
    %v422 = vadd.f32 %v420, %v421
    %v423 = vrot.slane %v422, 1
    %v424 = vadd.f32 %v422, %v423
    %v425 = vld [vmem:[#allocation2] sm:$0x1]
    %427 = vset.pattern.permute.xlu0 0
    %428 = vperm.xlu0 %427, %v425
    %v429 = vpop.permute.xlu0 %428
    %v431 = vlaneseq
    %v432 = vshrl.u32 %v431, 7
    %v433 = vsub.s32 0, %v432
    %v434 = vrot.slane %v429, %v433
    %v435 = vadd.f32 %v424, %v434
    %436 = vst [vmem:[#allocation3] sm:$0x1] %v435
    // Predicated region
    $region22: #{tpu_custom_call.1} parent=1 // pred_check
      _
    $region23: #{tpu_custom_call.1} parent=1 // pred_check_branch
      %438 = sbr.rel (0) target = $region25
    $region24: #{tpu_custom_call.1} parent=1 // pred_region
      %s440 = ssub.s32 16, 16
      %441 = vsyncadd [#allocation4], %s440
      %s443 = sshll.u32 [#allocation3], 4
      %s444 = int_to_ptr.vmem [resolvable:$true] %s443
      %446 = dma.vmem_to_hbm [thread:$0]  %s444, 16, %s5, [#allocation4]
    $region25: #{tpu_custom_call.1} parent=1 // pred_fallthru
      _
    // Predicated region
    $region26: #{tpu_custom_call.1} parent=1 // pred_check
      _
    $region27: #{tpu_custom_call.1} parent=1 // pred_check_branch
      %448 = sbr.rel (0) target = $region29
    $region28: #{tpu_custom_call.1} parent=1 // pred_region
      %449 = dma.done [#allocation4], 16
    $region29: #{tpu_custom_call.1} parent=1 // pred_fallthru
      _
    %450 = vsyncpa [#allocation4], 1

</llo_original>
